<compile_context>
chip_gen: v7x
topology: tpu7x:2x2x1
jax: 0.10.0
libtpu: 0.0.40
codegen_flags: <defaults>
</compile_context>

<pallas_src>
import jax
import jax.numpy as jnp
from jax.experimental import pallas as pl
from jax.experimental.pallas import tpu as pltpu


def _linear_rec_kernel(y_ref, w1_ref, b1_ref, w2_ref, b2_ref, o_ref):
    """Fused 2-layer MLP on lane-folded tiles: o = relu(y @ W1 + b1) @ W2 + b2."""
    y = y_ref[...]
    # Layer 1 (block-diag Linear + ReLU): MXU matmul, f32 accumulate.
    h = jnp.dot(y, w1_ref[...], preferred_element_type=jnp.float32) + b1_ref[...]
    h = jnp.maximum(h, 0.0)
    # Layer 2 (block-diag Linear).  Casting the f32 accumulator to the weight dtype
    # before the MXU feed is deliberate; for f32 weights it is a no-op.
    out = jnp.dot(h.astype(w2_ref.dtype), w2_ref[...],
                  preferred_element_type=jnp.float32) + b2_ref[...]
    o_ref[...] = out.astype(o_ref.dtype)


def _tpu_generation():
    try:
        kind = jax.devices()[0].device_kind.lower()
    except Exception:
        return ""
    for g in ("v7", "v6", "v5", "v4", "v3", "v2"):
        if g in kind:
            return g
    return ""


def _default_fold(gen):
    # v5-class (and older): 4x fold (128x128 / 128x64 block-diag) keeps the extra
    # matmul work off the critical path of this HBM-bound kernel (smaller, f32
    # multi-pass MXU).  v6e/v7x (or unknown): 8x fold -> fully 128-lane-dense tiles.
    return 4 if gen in ("v2", "v3", "v4", "v5") else 8


def _default_min_grid_steps(gen):
    # v5e/v6e: single TensorCore -> the grid is a strictly serial loop, so don't
    # shrink tiles just to add steps.  v7x: 2 TCs -> 2 'parallel' steps feed both.
    return 2 if gen == "v7" else 1


# Conservative VMEM budget for the streamed tiles (weights add ~0.4 MiB on top),
# well under v5e's 16 MiB and v6e/v7x's 32 MiB scoped-VMEM defaults.
_VMEM_TILE_BUDGET_BYTES = 8 << 20


def _max_tile_rows(lanes_in, lanes_h, lanes_out):
    # f32 bytes held in VMEM per folded row: y tile x2 buffers + out tile x2 buffers
    # + hidden intermediate.  Lane-dense tiles => VMEM footprint == logical bytes.
    per_row = 4 * (2 * lanes_in + 2 * lanes_out + lanes_h)
    rows = _VMEM_TILE_BUDGET_BYTES // per_row
    return max(8, (rows // 8) * 8)


def _choose_batch_tile(n_rows, requested, min_grid_steps, max_rows):
    """Pick a folded-row tile: big enough to amortize ~0.35 us/step overhead, small
    enough for the VMEM budget, multiple of 8 sublanes (or the full row count)."""
    if requested is None:
        bt = min(max_rows, max(1, -(-n_rows // min_grid_steps)))
    else:
        bt = int(requested)
    if bt >= n_rows:
        return n_rows                       # one full block == full array dim (legal)
    bt = max(8, (bt // 8) * 8)              # sublane alignment
    return n_rows if bt >= n_rows else bt   # partial last block handled by clamping


def linear_rec_forward(y, w1, b1, w2, b2, *, fold=None, batch_tile=None,
                       min_grid_steps=None):
    """Pallas implementation of LinearRec.forward(x, y) == sequential(y).

    `fold` = number of batch rows folded into the lane axis (block-diagonal weights);
    `batch_tile` is measured in *folded* rows.
    """
    B, D_in = y.shape
    H = w1.shape[1]
    D_out = w2.shape[1]

    gen = _tpu_generation()
    if fold is None:
        fold = _default_fold(gen)
    if min_grid_steps is None:
        min_grid_steps = _default_min_grid_steps(gen)

    # Pad only up to the next multiple of `fold` so the lane-fold reshape is legal
    # (copies y only in the ragged case; the common aligned case is zero-copy).
    rem = B % fold
    y_in = jnp.pad(y, ((0, fold - rem), (0, 0))) if rem else y
    Bp = y_in.shape[0]
    Bf = Bp // fold

    lanes_in, lanes_h, lanes_out = fold * D_in, fold * H, fold * D_out
    y_f = y_in.reshape(Bf, lanes_in)   # zero-copy row fold (contiguous row-major)

    # Block-diagonal weight expansion + tiled biases.
    # TODO(synk): in a real model, precompute/cache these (or fuse this MLP with its
    # adjacent producer/consumer) instead of rebuilding the block-diag weights per call.
    w1_blk = jnp.kron(jnp.eye(fold, dtype=w1.dtype), w1)   # (fold*D_in, fold*H)
    w2_blk = jnp.kron(jnp.eye(fold, dtype=w2.dtype), w2)   # (fold*H, fold*D_out)
    b1_blk = jnp.tile(b1.reshape(1, H), (1, fold))         # (1, fold*H)
    b2_blk = jnp.tile(b2.reshape(1, D_out), (1, fold))     # (1, fold*D_out)

    bt = _choose_batch_tile(Bf, batch_tile, min_grid_steps,
                            _max_tile_rows(lanes_in, lanes_h, lanes_out))
    grid_steps = pl.cdiv(Bf, bt)   # Pallas clamps the partial last block (no padding)

    out_f = pl.pallas_call(
        _linear_rec_kernel,
        out_shape=jax.ShapeDtypeStruct((Bf, lanes_out), y.dtype),
        grid_spec=pltpu.PrefetchScalarGridSpec(
            num_scalar_prefetch=0,
            grid=(grid_steps,),
            in_specs=[
                pl.BlockSpec((bt, lanes_in), lambda i: (i, 0)),       # folded y (streams)
                pl.BlockSpec((lanes_in, lanes_h), lambda i: (0, 0)),  # W1_blk (resident)
                pl.BlockSpec((1, lanes_h), lambda i: (0, 0)),         # b1     (resident)
                pl.BlockSpec((lanes_h, lanes_out), lambda i: (0, 0)), # W2_blk (resident)
                pl.BlockSpec((1, lanes_out), lambda i: (0, 0)),       # b2     (resident)
            ],
            out_specs=pl.BlockSpec((bt, lanes_out), lambda i: (i, 0)),
        ),
        compiler_params=pltpu.CompilerParams(
            dimension_semantics=("parallel",)),   # batch axis -> both TCs on v7x
    )(y_f, w1_blk, b1_blk, w2_blk, b2_blk)

    out = out_f.reshape(Bp, D_out)   # zero-copy row unfold
    return out[:B] if rem else out


def _init_linear(key, fan_in, fan_out, dtype=jnp.float32):
    """Deterministic init mimicking nn.Linear (uniform +/- 1/sqrt(fan_in)).
    Returned weight is [in, out] (transposed vs PyTorch's [out, in])."""
    kw, kb = jax.random.split(key)
    bound = 1.0 / (fan_in ** 0.5)
    w = jax.random.uniform(kw, (fan_in, fan_out), dtype, minval=-bound, maxval=bound)
    b = jax.random.uniform(kb, (fan_out,), dtype, minval=-bound, maxval=bound)
    return w, b


if __name__ == "__main__":
    in_features, hidden, out_features = 32, 32, 16

    key = jax.random.PRNGKey(0)
    k_a, k_b, k_l1, k_l2 = jax.random.split(key, 4)

    w1, b1 = _init_linear(k_l1, in_features, hidden)      # Linear(32, 32)
    w2, b2 = _init_linear(k_l2, hidden, out_features)     # Linear(32, 16)

    def reference(y):
        return jnp.maximum(y @ w1 + b1, 0.0) @ w2 + b2

    # Case A: fold-aligned batch (zero-copy reshapes, no padding), forced small tile
    # so the grid has multiple steps and a Pallas-clamped partial last block.
    y_a = jax.random.normal(k_a, (72, in_features), jnp.float32)
    out_a = jax.block_until_ready(
        linear_rec_forward(y_a, w1, b1, w2, b2, batch_tile=8))

    # Case B: ragged batch (not a multiple of the fold) -> minimal pad-to-fold path,
    # auto-chosen tile (single grid step at this size).
    y_b = jax.random.normal(k_b, (21, in_features), jnp.float32)
    out_b = jax.block_until_ready(
        linear_rec_forward(y_b, w1, b1, w2, b2))

    assert out_a.shape == (72, out_features)
    assert out_b.shape == (21, out_features)
    assert jnp.allclose(out_a, reference(y_a), atol=1e-5, rtol=1e-5)
    assert jnp.allclose(out_b, reference(y_b), atol=1e-5, rtol=1e-5)

    print("KERNEL_OK")
</pallas_src>

<mosaic_0001>
module attributes {stable_mosaic.version = 11 : i64} {
  func.func @_linear_rec_kernel(%arg0: i32, %arg1: memref<8x256xf32, #tpu.memory_space<vmem>>, %arg2: memref<256x256xf32, #tpu.memory_space<vmem>>, %arg3: memref<1x256xf32, #tpu.memory_space<vmem>>, %arg4: memref<256x128xf32, #tpu.memory_space<vmem>>, %arg5: memref<1x128xf32, #tpu.memory_space<vmem>>, %arg6: memref<8x128xf32, #tpu.memory_space<vmem>>) attributes {dimension_semantics = [#tpu.dimension_semantics<parallel>], iteration_bounds = array<i64: 2>, scalar_prefetch = 0 : i64, scratch_operands = 0 : i64, tpu.core_type = #tpu.core_type<tc>, window_params = [{transform_indices = @transform_0, window_bounds = array<i64: 8, 256>}, {pipeline_mode = #tpu.pipeline_mode<synchronous>, transform_indices = @transform_1, window_bounds = array<i64: 256, 256>}, {pipeline_mode = #tpu.pipeline_mode<synchronous>, transform_indices = @transform_2, window_bounds = array<i64: 1, 256>}, {pipeline_mode = #tpu.pipeline_mode<synchronous>, transform_indices = @transform_3, window_bounds = array<i64: 256, 128>}, {pipeline_mode = #tpu.pipeline_mode<synchronous>, transform_indices = @transform_4, window_bounds = array<i64: 1, 128>}, {transform_indices = @transform_5, window_bounds = array<i64: 8, 128>}]} {
    %c0 = arith.constant 0 : index
    %c0_0 = arith.constant 0 : index
    %0 = vector.load %arg1[%c0, %c0_0] : memref<8x256xf32, #tpu.memory_space<vmem>>, vector<8x256xf32>
    %c0_1 = arith.constant 0 : index
    %c0_2 = arith.constant 0 : index
    %1 = vector.load %arg2[%c0_1, %c0_2] : memref<256x256xf32, #tpu.memory_space<vmem>>, vector<256x256xf32>
    %cst = arith.constant dense<0.000000e+00> : vector<8x256xf32>
    %2 = tpu.matmul %0, %1, %cst {dimension_numbers = #tpu.dot_dimension_numbers<[1], [0], [0], [1], [0, 0, 1, 1], [], []>} : vector<8x256xf32>, vector<256x256xf32>, vector<8x256xf32> -> vector<8x256xf32>
    %c0_3 = arith.constant 0 : index
    %c0_4 = arith.constant 0 : index
    %3 = vector.load %arg3[%c0_3, %c0_4] : memref<1x256xf32, #tpu.memory_space<vmem>>, vector<1x256xf32>
    %4 = vector.broadcast %3 : vector<1x256xf32> to vector<8x256xf32>
    %5 = arith.addf %2, %4 : vector<8x256xf32>
    %cst_5 = arith.constant 0.000000e+00 : f32
    %6 = vector.broadcast %cst_5 : f32 to vector<8x256xf32>
    %7 = arith.maximumf %5, %6 : vector<8x256xf32>
    %c0_6 = arith.constant 0 : index
    %c0_7 = arith.constant 0 : index
    %8 = vector.load %arg4[%c0_6, %c0_7] : memref<256x128xf32, #tpu.memory_space<vmem>>, vector<256x128xf32>
    %cst_8 = arith.constant dense<0.000000e+00> : vector<8x128xf32>
    %9 = tpu.matmul %7, %8, %cst_8 {dimension_numbers = #tpu.dot_dimension_numbers<[1], [0], [0], [1], [0, 0, 1, 1], [], []>} : vector<8x256xf32>, vector<256x128xf32>, vector<8x128xf32> -> vector<8x128xf32>
    %c0_9 = arith.constant 0 : index
    %c0_10 = arith.constant 0 : index
    %10 = vector.load %arg5[%c0_9, %c0_10] : memref<1x128xf32, #tpu.memory_space<vmem>>, vector<1x128xf32>
    %11 = vector.broadcast %10 : vector<1x128xf32> to vector<8x128xf32>
    %12 = arith.addf %9, %11 : vector<8x128xf32>
    %c0_11 = arith.constant 0 : index
    %c0_12 = arith.constant 0 : index
    %13 = vector.load %arg6[%c0_11, %c0_12] : memref<8x128xf32, #tpu.memory_space<vmem>>, vector<8x128xf32>
    tpu.vector_store %arg6[%c0_11, %c0_12], %12 {strides = array<i32>} : memref<8x128xf32, #tpu.memory_space<vmem>>, vector<8x128xf32>,
    return
  }
  func.func @transform_0(%arg0: i32) -> (i32, i32) {
    %c0_i32 = arith.constant 0 : i32
    %c0_i32_0 = arith.constant 0 : i32
    return %arg0, %c0_i32 : i32, i32
  }
  func.func @transform_1(%arg0: i32) -> (i32, i32) {
    %c0_i32 = arith.constant 0 : i32
    %c0_i32_0 = arith.constant 0 : i32
    %c0_i32_1 = arith.constant 0 : i32
    return %c0_i32, %c0_i32_0 : i32, i32
  }
  func.func @transform_2(%arg0: i32) -> (i32, i32) {
    %c0_i32 = arith.constant 0 : i32
    %c0_i32_0 = arith.constant 0 : i32
    %c0_i32_1 = arith.constant 0 : i32
    return %c0_i32, %c0_i32_0 : i32, i32
  }
  func.func @transform_3(%arg0: i32) -> (i32, i32) {
    %c0_i32 = arith.constant 0 : i32
    %c0_i32_0 = arith.constant 0 : i32
    %c0_i32_1 = arith.constant 0 : i32
    return %c0_i32, %c0_i32_0 : i32, i32
  }
  func.func @transform_4(%arg0: i32) -> (i32, i32) {
    %c0_i32 = arith.constant 0 : i32
    %c0_i32_0 = arith.constant 0 : i32
    %c0_i32_1 = arith.constant 0 : i32
    return %c0_i32, %c0_i32_0 : i32, i32
  }
  func.func @transform_5(%arg0: i32) -> (i32, i32) {
    %c0_i32 = arith.constant 0 : i32
    %c0_i32_0 = arith.constant 0 : i32
    return %arg0, %c0_i32 : i32, i32
  }
}

</mosaic_0001>

<llo_original>
// kernel: tpu_custom_call.1
$region0: #{tpu_custom_call.1}
  #allocation0 [shape = 'u32[]', space=smem, size = 0x4, offset = 0x4, fixed_abs, tag = 'smem constant byte address 0x4 - core index']
  #allocation1 [shape = 'u32[144,128]{1,0:T(1,128)}', space=vmem, size = 0x12000, scoped, tag = 'internal scratch']
  %s0 = inlined_call_operand.hbm [shape: f32[9,256], index: 0, kind: input, shape index: {}]
  %s1 = inlined_call_operand.hbm [shape: f32[256,256], index: 1, kind: input, shape index: {}]
  %s2 = inlined_call_operand.vmem [shape: f32[1,256], index: 2, kind: input, shape index: {}]
  %s3 = inlined_call_operand.hbm [shape: f32[256,128], index: 3, kind: input, shape index: {}]
  %s4 = inlined_call_operand.vmem [shape: f32[1,128], index: 4, kind: input, shape index: {}]
  %s5 = inlined_call_operand.hbm [shape: f32[9,128], index: 5, kind: output, shape index: {}]
  %s6 = sld [smem:[#allocation0]]
  $region65: #{tpu_custom_call.1} parent=0
    _
  %s8 = ssub.s32 1, %s6
  %s9 = scalar_select 0, %s8, %s6
  $region1: #{tpu_custom_call.1} parent=0
    #allocation2 [shape = 'u8[16384]{0}', space=vmem, size = 0x4000, scoped, tag = 'input window, operand 0']
    #allocation3 [shape = 's32[2]{0}', space=sflag, size = 0x8, scoped, tag = 'scoped memory for tpu_custom_call.1']
    #allocation4 [shape = 's32[2]{0}', space=sflag, size = 0x8, scoped, tag = 'scoped memory for tpu_custom_call.1']
    #allocation5 [shape = 'u8[262144]{0}', space=vmem, size = 0x40000, scoped, tag = 'input window, operand 1, single buffered']
    #allocation6 [shape = 's32[1]{0}', space=sflag, size = 0x4, scoped, tag = 'scoped memory for tpu_custom_call.1']
    #allocation7 [shape = 'u8[131072]{0}', space=vmem, size = 0x20000, scoped, tag = 'input window, operand 3, single buffered']
    #allocation8 [shape = 'u8[8192]{0}', space=vmem, size = 0x2000, scoped, tag = 'output window, operand 0']
    %10 = vsyncpa [#allocation3], 0
    %s11 = scalar_lea.sflag [#allocation3], 1
    %12 = vsyncpa %s11, 0
    %13 = vsyncpa [#allocation6], 0
    %14 = vsyncpa [#allocation4], 0
    %s15 = scalar_lea.sflag [#allocation4], 1
    %16 = vsyncpa %s15, 0
    loop: start=0, step=1, limit=4
    $region2: #{tpu_custom_call.1} parent=1 // loop_pre_header
      _
    $region3: #{tpu_custom_call.1} parent=1 // loop_header
      %s18 = sphi 0, %s22
      %p19 = scmp.ge.s32.totalorder %s18, 4
      %s28 = sphi 0, %s30
      %s31 = sphi 0, %s28
      %s32 = sphi 0, %s31
      %s48 = sphi 0, %s32
      %s52 = sphi 0, %s52
      %s54 = sphi 0, %s52
      %s55 = sphi 0, %s54
      %s69 = sphi 0, %s55
      %s73 = sphi 0, %s73
      %s75 = sphi 0, %s73
      %s76 = sphi 0, %s75
      %s90 = sphi 0, %s76
      %s94 = sphi 0, %s94
      %s96 = sphi 0, %s94
      %s97 = sphi 0, %s96
      %s111 = sphi 0, %s97
      %s115 = sphi 0, %s115
      %s117 = sphi 0, %s115
      %s118 = sphi 0, %s117
      %s132 = sphi 0, %s118
      %s138 = sphi 0, %s140
      %s141 = sphi 0, %s138
      %s142 = sphi 0, %s141
      %s158 = sphi 0, %s142
    $region4: #{tpu_custom_call.1} parent=1 // loop_header_branch
      %21 = sbr.rel (%p19) target = $region8
    $region5: #{tpu_custom_call.1} parent=1 // loop_body
      %s23 = ssub.s32 %s18, 1
      %s24 = ssub.s32 %s18, 2
      %s25 = sadd.s32 %s18, 1
      %s26 = ssub.s32 %s18, %s25
      %p27 = scmp.eq.s32.totalorder %s26, 0
      %s29 = sadd.s32 %s28, 1
      %s30 = scalar_select %p27, %s28, %s29
      %p33 = pneg %p27
      %p34 = scmp.eq.s32.totalorder %s18, 1
      %p35 = por %p33, %p34
      %p36 = scmp.ne.s32.totalorder %s28, %s31
      %p37 = scmp.eq.s32.totalorder %s18, 0
      %p38 = por %p36, %p37
      %p39 = scmp.ne.s32.totalorder %s28, %s31
      %p40 = scmp.eq.s32.totalorder %s23, 1
      %p41 = por %p39, %p40
      %p42 = scmp.ne.s32.totalorder %s31, %s32
      %p43 = scmp.eq.s32.totalorder %s23, 0
      %p44 = por %p42, %p43
      %p45 = scmp.ne.s32.totalorder %s31, %s32
      %p46 = scmp.eq.s32.totalorder %s24, 1
      %p47 = por %p45, %p46
      %p49 = scmp.ne.s32.totalorder %s32, %s48
      %p50 = scmp.eq.s32.totalorder %s24, 0
      %p51 = por %p49, %p50
      %s53 = sadd.s32 %s52, 1
      %p56 = scmp.eq.s32.totalorder %s18, 1
      %p57 = scmp.ne.s32.totalorder %s52, %s54
      %p58 = scmp.eq.s32.totalorder %s18, 0
      %p59 = por %p57, %p58
      %p60 = scmp.ne.s32.totalorder %s52, %s54
      %p61 = scmp.eq.s32.totalorder %s23, 1
      %p62 = por %p60, %p61
      %p63 = scmp.ne.s32.totalorder %s54, %s55
      %p64 = scmp.eq.s32.totalorder %s23, 0
      %p65 = por %p63, %p64
      %p66 = scmp.ne.s32.totalorder %s54, %s55
      %p67 = scmp.eq.s32.totalorder %s24, 1
      %p68 = por %p66, %p67
      %p70 = scmp.ne.s32.totalorder %s55, %s69
      %p71 = scmp.eq.s32.totalorder %s24, 0
      %p72 = por %p70, %p71
      %s74 = sadd.s32 %s73, 1
      %p77 = scmp.eq.s32.totalorder %s18, 1
      %p78 = scmp.ne.s32.totalorder %s73, %s75
      %p79 = scmp.eq.s32.totalorder %s18, 0
      %p80 = por %p78, %p79
      %p81 = scmp.ne.s32.totalorder %s73, %s75
      %p82 = scmp.eq.s32.totalorder %s23, 1
      %p83 = por %p81, %p82
      %p84 = scmp.ne.s32.totalorder %s75, %s76
      %p85 = scmp.eq.s32.totalorder %s23, 0
      %p86 = por %p84, %p85
      %p87 = scmp.ne.s32.totalorder %s75, %s76
      %p88 = scmp.eq.s32.totalorder %s24, 1
      %p89 = por %p87, %p88
      %p91 = scmp.ne.s32.totalorder %s76, %s90
      %p92 = scmp.eq.s32.totalorder %s24, 0
      %p93 = por %p91, %p92
      %s95 = sadd.s32 %s94, 1
      %p98 = scmp.eq.s32.totalorder %s18, 1
      %p99 = scmp.ne.s32.totalorder %s94, %s96
      %p100 = scmp.eq.s32.totalorder %s18, 0
      %p101 = por %p99, %p100
      %p102 = scmp.ne.s32.totalorder %s94, %s96
      %p103 = scmp.eq.s32.totalorder %s23, 1
      %p104 = por %p102, %p103
      %p105 = scmp.ne.s32.totalorder %s96, %s97
      %p106 = scmp.eq.s32.totalorder %s23, 0
      %p107 = por %p105, %p106
      %p108 = scmp.ne.s32.totalorder %s96, %s97
      %p109 = scmp.eq.s32.totalorder %s24, 1
      %p110 = por %p108, %p109
      %p112 = scmp.ne.s32.totalorder %s97, %s111
      %p113 = scmp.eq.s32.totalorder %s24, 0
      %p114 = por %p112, %p113
      %s116 = sadd.s32 %s115, 1
      %p119 = scmp.eq.s32.totalorder %s18, 1
      %p120 = scmp.ne.s32.totalorder %s115, %s117
      %p121 = scmp.eq.s32.totalorder %s18, 0
      %p122 = por %p120, %p121
      %p123 = scmp.ne.s32.totalorder %s115, %s117
      %p124 = scmp.eq.s32.totalorder %s23, 1
      %p125 = por %p123, %p124
      %p126 = scmp.ne.s32.totalorder %s117, %s118
      %p127 = scmp.eq.s32.totalorder %s23, 0
      %p128 = por %p126, %p127
      %p129 = scmp.ne.s32.totalorder %s117, %s118
      %p130 = scmp.eq.s32.totalorder %s24, 1
      %p131 = por %p129, %p130
      %p133 = scmp.ne.s32.totalorder %s118, %s132
      %p134 = scmp.eq.s32.totalorder %s24, 0
      %p135 = por %p133, %p134
      %s136 = ssub.s32 %s18, %s25
      %p137 = scmp.eq.s32.totalorder %s136, 0
      %s139 = sadd.s32 %s138, 1
      %s140 = scalar_select %p137, %s138, %s139
      %p143 = pneg %p137
      %p144 = scmp.eq.s32.totalorder %s18, 1
      %p145 = por %p143, %p144
      %p146 = scmp.ne.s32.totalorder %s138, %s141
      %p147 = scmp.eq.s32.totalorder %s18, 0
      %p148 = por %p146, %p147
      %p149 = scmp.ne.s32.totalorder %s138, %s141
      %p150 = scmp.eq.s32.totalorder %s23, 1
      %p151 = por %p149, %p150
      %p152 = scmp.ne.s32.totalorder %s141, %s142
      %p153 = scmp.eq.s32.totalorder %s23, 0
      %p154 = por %p152, %p153
      %p155 = scmp.ne.s32.totalorder %s141, %s142
      %p156 = scmp.eq.s32.totalorder %s24, 1
      %p157 = por %p155, %p156
      %p159 = scmp.ne.s32.totalorder %s142, %s158
      %p160 = scmp.eq.s32.totalorder %s24, 0
      %p161 = por %p159, %p160
      %p162 = scmp.le.s32.totalorder 1, %s18
      %p163 = scmp.lt.s32.totalorder %s18, 3
      %p164 = pnand %p162, %p163
      %p165 = pneg %p164
      // Predicated region
      $region9: #{tpu_custom_call.1} parent=5 // pred_check
        _
      $region10: #{tpu_custom_call.1} parent=5 // pred_check_branch
        %167 = sbr.rel (%p164) target = $region12
      $region11: #{tpu_custom_call.1} parent=5 // pred_region
        %s168 = ssub.s32 %s18, 1
        // Predicated region
        $region13: #{tpu_custom_call.1} parent=11 // pred_check
          %p169 = pneg %p65
        $region14: #{tpu_custom_call.1} parent=11 // pred_check_branch
          %171 = sbr.rel (%p169) target = $region16
        $region15: #{tpu_custom_call.1} parent=11 // pred_region
          %s173 = ssub.s32 8192, 8192
          %174 = vsyncadd [#allocation6], %s173
          %s175 = sshll.u32 [#allocation5], 4
          %s176 = int_to_ptr.vmem [resolvable:$true] %s175
          %181 = dma.hbm_to_vmem [thread:$0]  %s1, 8192, %s176, [#allocation6], 256, 256, 16
        $region16: #{tpu_custom_call.1} parent=11 // pred_fallthru
          _
        // Predicated region
        $region17: #{tpu_custom_call.1} parent=11 // pred_check
          %p182 = pneg %p86
        $region18: #{tpu_custom_call.1} parent=11 // pred_check_branch
          %184 = sbr.rel (%p182) target = $region20
        $region19: #{tpu_custom_call.1} parent=11 // pred_region
          _
        $region20: #{tpu_custom_call.1} parent=11 // pred_fallthru
          _
        // Predicated region
        $region21: #{tpu_custom_call.1} parent=11 // pred_check
          %p185 = pneg %p107
        $region22: #{tpu_custom_call.1} parent=11 // pred_check_branch
          %187 = sbr.rel (%p185) target = $region24
        $region23: #{tpu_custom_call.1} parent=11 // pred_region
          %s189 = ssub.s32 4096, 4096
          %190 = vsyncadd [#allocation6], %s189
          %s191 = sshll.u32 [#allocation7], 4
          %s192 = int_to_ptr.vmem [resolvable:$true] %s191
          %197 = dma.hbm_to_vmem [thread:$0]  %s3, 4096, %s192, [#allocation6], 128, 128, 8
        $region24: #{tpu_custom_call.1} parent=11 // pred_fallthru
          _
        // Predicated region
        $region25: #{tpu_custom_call.1} parent=11 // pred_check
          %p198 = pneg %p128
        $region26: #{tpu_custom_call.1} parent=11 // pred_check_branch
          %200 = sbr.rel (%p198) target = $region28
        $region27: #{tpu_custom_call.1} parent=11 // pred_region
          _
        $region28: #{tpu_custom_call.1} parent=11 // pred_fallthru
          _
      $region12: #{tpu_custom_call.1} parent=5 // pred_fallthru
        _
      %p201 = scmp.lt.s32.totalorder %s18, 2
      // Predicated region
      $region29: #{tpu_custom_call.1} parent=5 // pred_check
        %p202 = pneg %p201
      $region30: #{tpu_custom_call.1} parent=5 // pred_check_branch
        %204 = sbr.rel (%p202) target = $region32
      $region31: #{tpu_custom_call.1} parent=5 // pred_region
        // Predicated region
        $region33: #{tpu_custom_call.1} parent=31 // pred_check
          %p205 = pneg %p38
        $region34: #{tpu_custom_call.1} parent=31 // pred_check_branch
          %207 = sbr.rel (%p205) target = $region36
        $region35: #{tpu_custom_call.1} parent=31 // pred_region
          %s208 = sand.u32 %s28, 1
          %s209 = scalar_lea.sflag [#allocation3], %s208
          %s210 = sand.u32 %s28, 1
          %s211 = smul.addr %s210, 16
          %s212 = scalar_lea.vmem [#allocation2], %s211
          %s214 = ssub.s32 256, 256
          %215 = vsyncadd %s209, %s214
          %s216 = smul.addr %s18, 2
          %s217 = smul.addr %s216, 128
          %s218 = scalar_lea.hbm %s0, %s217
          %s220 = sshll.u32 %s212, 4
          %s221 = int_to_ptr.vmem [resolvable:$true] %s220
          %223 = dma.hbm_to_vmem [thread:$0]  %s218, 256, %s221, %s209
        $region36: #{tpu_custom_call.1} parent=31 // pred_fallthru
          _
      $region32: #{tpu_custom_call.1} parent=5 // pred_fallthru
        _
      %p224 = scmp.le.s32.totalorder 1, %s18
      %p225 = scmp.lt.s32.totalorder %s18, 3
      %p226 = pnand %p224, %p225
      %p227 = pneg %p226
      // Predicated region
      $region37: #{tpu_custom_call.1} parent=5 // pred_check
        _
      $region38: #{tpu_custom_call.1} parent=5 // pred_check_branch
        %229 = sbr.rel (%p226) target = $region40
      $region39: #{tpu_custom_call.1} parent=5 // pred_region
        %s230 = ssub.s32 %s18, 1
        %s231 = sand.u32 %s31, 1
        %s232 = scalar_lea.sflag [#allocation3], %s231
        %s233 = sand.u32 %s31, 1
        %s234 = smul.addr %s233, 16
        %s235 = scalar_lea.vmem [#allocation2], %s234
        // Predicated region
        $region41: #{tpu_custom_call.1} parent=39 // pred_check
          %p236 = pneg %p44
        $region42: #{tpu_custom_call.1} parent=39 // pred_check_branch
          %238 = sbr.rel (%p236) target = $region44
        $region43: #{tpu_custom_call.1} parent=39 // pred_region
          %239 = dma.done %s232, 256
        $region44: #{tpu_custom_call.1} parent=39 // pred_fallthru
          _
        // Predicated region
        $region45: #{tpu_custom_call.1} parent=39 // pred_check
          %p240 = pneg %p65
        $region46: #{tpu_custom_call.1} parent=39 // pred_check_branch
          %242 = sbr.rel (%p240) target = $region48
        $region47: #{tpu_custom_call.1} parent=39 // pred_region
          %243 = dma.done [#allocation6], 8192
        $region48: #{tpu_custom_call.1} parent=39 // pred_fallthru
          _
        // Predicated region
        $region49: #{tpu_custom_call.1} parent=39 // pred_check
          %p244 = pneg %p107
        $region50: #{tpu_custom_call.1} parent=39 // pred_check_branch
          %246 = sbr.rel (%p244) target = $region52
        $region51: #{tpu_custom_call.1} parent=39 // pred_region
          %247 = dma.done [#allocation6], 4096
        $region52: #{tpu_custom_call.1} parent=39 // pred_fallthru
          _
        %s248 = sand.u32 %s31, 1
        %s249 = scalar_lea.sflag [#allocation3], %s248
        %s250 = sand.u32 %s31, 1
        %s251 = smul.addr %s250, 16
        %s252 = scalar_lea.vmem [#allocation2], %s251
        %p253 = pneg %p44
        %p254 = pneg %p41
        %p255 = pneg %p65
        %p256 = pneg %p62
        %p257 = pneg %p86
        %p258 = pneg %p83
        %p259 = pneg %p107
        %p260 = pneg %p104
        %p261 = pneg %p128
        %p262 = pneg %p125
        %p263 = pneg %p154
        %p264 = pneg %p151
        %s265 = sand.u32 %s141, 1
        %s266 = scalar_lea.sflag [#allocation4], %s265
        %s267 = sand.u32 %s141, 1
        %s268 = smul.addr %s267, 8
        %s269 = scalar_lea.vmem [#allocation8], %s268
        %v270 = vld [vmem:[%s235] sm:$0xff]
        %v271 = vld [vmem:[%s235 + $0x8] sm:$0xff]
        %v272 = vld [vmem:[#allocation5] sm:$0xff]
        %v273 = vld [vmem:[#allocation5 + $0x8] sm:$0xff]
        %v274 = vld [vmem:[#allocation5 + $0x10] sm:$0xff]
        %v275 = vld [vmem:[#allocation5 + $0x18] sm:$0xff]
        %v276 = vld [vmem:[#allocation5 + $0x20] sm:$0xff]
        %v277 = vld [vmem:[#allocation5 + $0x28] sm:$0xff]
        %v278 = vld [vmem:[#allocation5 + $0x30] sm:$0xff]
        %v279 = vld [vmem:[#allocation5 + $0x38] sm:$0xff]
        %v280 = vld [vmem:[#allocation5 + $0x40] sm:$0xff]
        %v281 = vld [vmem:[#allocation5 + $0x48] sm:$0xff]
        %v282 = vld [vmem:[#allocation5 + $0x50] sm:$0xff]
        %v283 = vld [vmem:[#allocation5 + $0x58] sm:$0xff]
        %v284 = vld [vmem:[#allocation5 + $0x60] sm:$0xff]
        %v285 = vld [vmem:[#allocation5 + $0x68] sm:$0xff]
        %v286 = vld [vmem:[#allocation5 + $0x70] sm:$0xff]
        %v287 = vld [vmem:[#allocation5 + $0x78] sm:$0xff]
        %v288 = vld [vmem:[#allocation5 + $0x80] sm:$0xff]
        %v289 = vld [vmem:[#allocation5 + $0x88] sm:$0xff]
        %v290 = vld [vmem:[#allocation5 + $0x90] sm:$0xff]
        %v291 = vld [vmem:[#allocation5 + $0x98] sm:$0xff]
        %v292 = vld [vmem:[#allocation5 + $0xa0] sm:$0xff]
        %v293 = vld [vmem:[#allocation5 + $0xa8] sm:$0xff]
        %v294 = vld [vmem:[#allocation5 + $0xb0] sm:$0xff]
        %v295 = vld [vmem:[#allocation5 + $0xb8] sm:$0xff]
        %v296 = vld [vmem:[#allocation5 + $0xc0] sm:$0xff]
        %v297 = vld [vmem:[#allocation5 + $0xc8] sm:$0xff]
        %v298 = vld [vmem:[#allocation5 + $0xd0] sm:$0xff]
        %v299 = vld [vmem:[#allocation5 + $0xd8] sm:$0xff]
        %v300 = vld [vmem:[#allocation5 + $0xe0] sm:$0xff]
        %v301 = vld [vmem:[#allocation5 + $0xe8] sm:$0xff]
        %v302 = vld [vmem:[#allocation5 + $0xf0] sm:$0xff]
        %v303 = vld [vmem:[#allocation5 + $0xf8] sm:$0xff]
        %v304 = vld [vmem:[#allocation5 + $0x100] sm:$0xff]
        %v305 = vld [vmem:[#allocation5 + $0x108] sm:$0xff]
        %v306 = vld [vmem:[#allocation5 + $0x110] sm:$0xff]
        %v307 = vld [vmem:[#allocation5 + $0x118] sm:$0xff]
        %v308 = vld [vmem:[#allocation5 + $0x120] sm:$0xff]
        %v309 = vld [vmem:[#allocation5 + $0x128] sm:$0xff]
        %v310 = vld [vmem:[#allocation5 + $0x130] sm:$0xff]
        %v311 = vld [vmem:[#allocation5 + $0x138] sm:$0xff]
        %v312 = vld [vmem:[#allocation5 + $0x140] sm:$0xff]
        %v313 = vld [vmem:[#allocation5 + $0x148] sm:$0xff]
        %v314 = vld [vmem:[#allocation5 + $0x150] sm:$0xff]
        %v315 = vld [vmem:[#allocation5 + $0x158] sm:$0xff]
        %v316 = vld [vmem:[#allocation5 + $0x160] sm:$0xff]
        %v317 = vld [vmem:[#allocation5 + $0x168] sm:$0xff]
        %v318 = vld [vmem:[#allocation5 + $0x170] sm:$0xff]
        %v319 = vld [vmem:[#allocation5 + $0x178] sm:$0xff]
        %v320 = vld [vmem:[#allocation5 + $0x180] sm:$0xff]
        %v321 = vld [vmem:[#allocation5 + $0x188] sm:$0xff]
        %v322 = vld [vmem:[#allocation5 + $0x190] sm:$0xff]
        %v323 = vld [vmem:[#allocation5 + $0x198] sm:$0xff]
        %v324 = vld [vmem:[#allocation5 + $0x1a0] sm:$0xff]
        %v325 = vld [vmem:[#allocation5 + $0x1a8] sm:$0xff]
        %v326 = vld [vmem:[#allocation5 + $0x1b0] sm:$0xff]
        %v327 = vld [vmem:[#allocation5 + $0x1b8] sm:$0xff]
        %v328 = vld [vmem:[#allocation5 + $0x1c0] sm:$0xff]
        %v329 = vld [vmem:[#allocation5 + $0x1c8] sm:$0xff]
        %v330 = vld [vmem:[#allocation5 + $0x1d0] sm:$0xff]
        %v331 = vld [vmem:[#allocation5 + $0x1d8] sm:$0xff]
        %v332 = vld [vmem:[#allocation5 + $0x1e0] sm:$0xff]
        %v333 = vld [vmem:[#allocation5 + $0x1e8] sm:$0xff]
        %v334 = vld [vmem:[#allocation5 + $0x1f0] sm:$0xff]
        %v335 = vld [vmem:[#allocation5 + $0x1f8] sm:$0xff]
        %v336 = vld [vmem:[%s2] sm:$0x3]
        %v338 = vlaneseq
        %v339 = vshrl.u32 %v338, 7
        %v340 = vsub.s32 0, %v339
        %v341 = vrot.slane %v336, %v340
        %v342 = vlaneseq
        %v343 = vshrl.u32 %v342, 7
        %v344 = vsub.s32 1, %v343
        %v345 = vrot.slane %v336, %v344
        %348 = vmatprep.subr.mxu0 %v273
        %349 = vmatpush1.msra.mxu0 %v272
        %350 = vmatprep.subr.mxu0 %v275
        %351 = vmatpush1.msra.mxu0 %v274
        %352 = vmatprep.subr.mxu0 %v277
        %353 = vmatpush1.msra.mxu0 %v276
        %354 = vmatprep.subr.mxu0 %v279
        %355 = vmatpush1.msra.mxu0 %v278
        %356 = vmatprep.subr.mxu0 %v281
        %357 = vmatpush1.msra.mxu0 %v280
        %358 = vmatprep.subr.mxu0 %v283
        %359 = vmatpush1.msra.mxu0 %v282
        %360 = vmatprep.subr.mxu0 %v285
        %361 = vmatpush1.msra.mxu0 %v284
        %362 = vmatprep.subr.mxu0 %v287
        %363 = vmatpush1.msra.mxu0 %v286
        %364 = vmatprep.subr.mxu0 %v289
        %365 = vmatpush1.msra.mxu0 %v288
        %366 = vmatprep.subr.mxu0 %v291
        %367 = vmatpush1.msra.mxu0 %v290
        %368 = vmatprep.subr.mxu0 %v293
        %369 = vmatpush1.msra.mxu0 %v292
        %370 = vmatprep.subr.mxu0 %v295
        %371 = vmatpush1.msra.mxu0 %v294
        %372 = vmatprep.subr.mxu0 %v297
        %373 = vmatpush1.msra.mxu0 %v296
        %374 = vmatprep.subr.mxu0 %v299
        %375 = vmatpush1.msra.mxu0 %v298
        %376 = vmatprep.subr.mxu0 %v301
        %377 = vmatpush1.msra.mxu0 %v300
        %378 = vmatprep.subr.mxu0 %v303
        %379 = vmatpush1.msra.mxu0 %v302
        %380 = vmatprep.subr.mxu0 %v305
        %381 = vmatpush1.msra.mxu0 %v304
        %382 = vmatprep.subr.mxu0 %v307
        %383 = vmatpush1.msra.mxu0 %v306
        %384 = vmatprep.subr.mxu0 %v309
        %385 = vmatpush1.msra.mxu0 %v308
        %386 = vmatprep.subr.mxu0 %v311
        %387 = vmatpush1.msra.mxu0 %v310
        %388 = vmatprep.subr.mxu0 %v313
        %389 = vmatpush1.msra.mxu0 %v312
        %390 = vmatprep.subr.mxu0 %v315
        %391 = vmatpush1.msra.mxu0 %v314
        %392 = vmatprep.subr.mxu0 %v317
        %393 = vmatpush1.msra.mxu0 %v316
        %394 = vmatprep.subr.mxu0 %v319
        %395 = vmatpush1.msra.mxu0 %v318
        %396 = vmatprep.subr.mxu0 %v321
        %397 = vmatpush1.msra.mxu0 %v320
        %398 = vmatprep.subr.mxu0 %v323
        %399 = vmatpush1.msra.mxu0 %v322
        %400 = vmatprep.subr.mxu0 %v325
        %401 = vmatpush1.msra.mxu0 %v324
        %402 = vmatprep.subr.mxu0 %v327
        %403 = vmatpush1.msra.mxu0 %v326
        %404 = vmatprep.subr.mxu0 %v329
        %405 = vmatpush1.msra.mxu0 %v328
        %406 = vmatprep.subr.mxu0 %v331
        %407 = vmatpush1.msra.mxu0 %v330
        %408 = vmatprep.subr.mxu0 %v333
        %409 = vmatpush1.msra.mxu0 %v332
        %410 = vmatprep.subr.mxu0 %v335
        %411 = vmatpush1.msra.mxu0 %v334
        %412 = vmatprep.mubr.f32.mxu0 %v271
        %413 = vmatmul.mubr.f32.gmra.mrb[0].mxu0 %v270
        %v414 = vpop.f32.mrb[0].mxu0
        %v415 = vadd.f32 %v341, %v414
        %v416 = vpop.f32.mrb[0].mxu0
        %v417 = vadd.f32 %v345, %v416
        %418 = vdwg.mxu0
        %v419 = vmax.f32 %v415, 0.0
        %v420 = vmax.f32 %v417, 0.0
        %v421 = vld [vmem:[#allocation7] sm:$0xff]
        %v422 = vld [vmem:[#allocation7 + $0x8] sm:$0xff]
        %v423 = vld [vmem:[#allocation7 + $0x10] sm:$0xff]
        %v424 = vld [vmem:[#allocation7 + $0x18] sm:$0xff]
        %v425 = vld [vmem:[#allocation7 + $0x20] sm:$0xff]
        %v426 = vld [vmem:[#allocation7 + $0x28] sm:$0xff]
        %v427 = vld [vmem:[#allocation7 + $0x30] sm:$0xff]
        %v428 = vld [vmem:[#allocation7 + $0x38] sm:$0xff]
        %v429 = vld [vmem:[#allocation7 + $0x40] sm:$0xff]
        %v430 = vld [vmem:[#allocation7 + $0x48] sm:$0xff]
        %v431 = vld [vmem:[#allocation7 + $0x50] sm:$0xff]
        %v432 = vld [vmem:[#allocation7 + $0x58] sm:$0xff]
        %v433 = vld [vmem:[#allocation7 + $0x60] sm:$0xff]
        %v434 = vld [vmem:[#allocation7 + $0x68] sm:$0xff]
        %v435 = vld [vmem:[#allocation7 + $0x70] sm:$0xff]
        %v436 = vld [vmem:[#allocation7 + $0x78] sm:$0xff]
        %v437 = vld [vmem:[#allocation7 + $0x80] sm:$0xff]
        %v438 = vld [vmem:[#allocation7 + $0x88] sm:$0xff]
        %v439 = vld [vmem:[#allocation7 + $0x90] sm:$0xff]
        %v440 = vld [vmem:[#allocation7 + $0x98] sm:$0xff]
        %v441 = vld [vmem:[#allocation7 + $0xa0] sm:$0xff]
        %v442 = vld [vmem:[#allocation7 + $0xa8] sm:$0xff]
        %v443 = vld [vmem:[#allocation7 + $0xb0] sm:$0xff]
        %v444 = vld [vmem:[#allocation7 + $0xb8] sm:$0xff]
        %v445 = vld [vmem:[#allocation7 + $0xc0] sm:$0xff]
        %v446 = vld [vmem:[#allocation7 + $0xc8] sm:$0xff]
        %v447 = vld [vmem:[#allocation7 + $0xd0] sm:$0xff]
        %v448 = vld [vmem:[#allocation7 + $0xd8] sm:$0xff]
        %v449 = vld [vmem:[#allocation7 + $0xe0] sm:$0xff]
        %v450 = vld [vmem:[#allocation7 + $0xe8] sm:$0xff]
        %v451 = vld [vmem:[#allocation7 + $0xf0] sm:$0xff]
        %v452 = vld [vmem:[#allocation7 + $0xf8] sm:$0xff]
        %v453 = vld [vmem:[%s4] sm:$0x1]
        %v455 = vlaneseq
        %v456 = vshrl.u32 %v455, 7
        %v457 = vsub.s32 0, %v456
        %v458 = vrot.slane %v453, %v457
        %460 = vmatprep.subr.mxu0 0.0
        %461 = vmatpush1.msra.mxu0 %v421
        %462 = vmatprep.subr.mxu0 0.0
        %463 = vmatpush1.msra.mxu0 %v422
        %464 = vmatprep.subr.mxu0 0.0
        %465 = vmatpush1.msra.mxu0 %v423
        %466 = vmatprep.subr.mxu0 0.0
        %467 = vmatpush1.msra.mxu0 %v424
        %468 = vmatprep.subr.mxu0 0.0
        %469 = vmatpush1.msra.mxu0 %v425
        %470 = vmatprep.subr.mxu0 0.0
        %471 = vmatpush1.msra.mxu0 %v426
        %472 = vmatprep.subr.mxu0 0.0
        %473 = vmatpush1.msra.mxu0 %v427
        %474 = vmatprep.subr.mxu0 0.0
        %475 = vmatpush1.msra.mxu0 %v428
        %476 = vmatprep.subr.mxu0 0.0
        %477 = vmatpush1.msra.mxu0 %v429
        %478 = vmatprep.subr.mxu0 0.0
        %479 = vmatpush1.msra.mxu0 %v430
        %480 = vmatprep.subr.mxu0 0.0
        %481 = vmatpush1.msra.mxu0 %v431
        %482 = vmatprep.subr.mxu0 0.0
        %483 = vmatpush1.msra.mxu0 %v432
        %484 = vmatprep.subr.mxu0 0.0
        %485 = vmatpush1.msra.mxu0 %v433
        %486 = vmatprep.subr.mxu0 0.0
        %487 = vmatpush1.msra.mxu0 %v434
        %488 = vmatprep.subr.mxu0 0.0
        %489 = vmatpush1.msra.mxu0 %v435
        %490 = vmatprep.subr.mxu0 0.0
        %491 = vmatpush1.msra.mxu0 %v436
        %492 = vmatprep.subr.mxu0 0.0
        %493 = vmatpush1.msra.mxu0 %v437
        %494 = vmatprep.subr.mxu0 0.0
        %495 = vmatpush1.msra.mxu0 %v438
        %496 = vmatprep.subr.mxu0 0.0
        %497 = vmatpush1.msra.mxu0 %v439
        %498 = vmatprep.subr.mxu0 0.0
        %499 = vmatpush1.msra.mxu0 %v440
        %500 = vmatprep.subr.mxu0 0.0
        %501 = vmatpush1.msra.mxu0 %v441
        %502 = vmatprep.subr.mxu0 0.0
        %503 = vmatpush1.msra.mxu0 %v442
        %504 = vmatprep.subr.mxu0 0.0
        %505 = vmatpush1.msra.mxu0 %v443
        %506 = vmatprep.subr.mxu0 0.0
        %507 = vmatpush1.msra.mxu0 %v444
        %508 = vmatprep.subr.mxu0 0.0
        %509 = vmatpush1.msra.mxu0 %v445
        %510 = vmatprep.subr.mxu0 0.0
        %511 = vmatpush1.msra.mxu0 %v446
        %512 = vmatprep.subr.mxu0 0.0
        %513 = vmatpush1.msra.mxu0 %v447
        %514 = vmatprep.subr.mxu0 0.0
        %515 = vmatpush1.msra.mxu0 %v448
        %516 = vmatprep.subr.mxu0 0.0
        %517 = vmatpush1.msra.mxu0 %v449
        %518 = vmatprep.subr.mxu0 0.0
        %519 = vmatpush1.msra.mxu0 %v450
        %520 = vmatprep.subr.mxu0 0.0
        %521 = vmatpush1.msra.mxu0 %v451
        %522 = vmatprep.subr.mxu0 0.0
        %523 = vmatpush1.msra.mxu0 %v452
        %524 = vmatprep.mubr.f32.mxu0 %v420
        %525 = vmatmul.mubr.f32.gmra.mrb[0].mxu0 %v419
        %v526 = vpop.f32.mrb[0].mxu0
        %v527 = vadd.f32 %v458, %v526
        %v528 = vpop.f32.mrb[0].mxu0
        %529 = vdwg.mxu0
        %530 = vst [vmem:[%s269] sm:$0xff] %v527
        %s531 = sand.u32 %s141, 1
        %s532 = scalar_lea.sflag [#allocation4], %s531
        %s533 = sand.u32 %s141, 1
        %s534 = smul.addr %s533, 8
        %s535 = scalar_lea.vmem [#allocation8], %s534
        // Predicated region
        $region53: #{tpu_custom_call.1} parent=39 // pred_check
          %p536 = pneg %p151
        $region54: #{tpu_custom_call.1} parent=39 // pred_check_branch
          %538 = sbr.rel (%p536) target = $region56
        $region55: #{tpu_custom_call.1} parent=39 // pred_region
          %s540 = ssub.s32 128, 128
          %541 = vsyncadd %s532, %s540
          %s542 = smul.addr %s23, 128
          %s543 = scalar_lea.hbm %s5, %s542
          %s545 = sshll.u32 %s535, 4
          %s546 = int_to_ptr.vmem [resolvable:$true] %s545
          %548 = dma.vmem_to_hbm [thread:$0]  %s546, 128, %s543, %s532
        $region56: #{tpu_custom_call.1} parent=39 // pred_fallthru
          _
      $region40: #{tpu_custom_call.1} parent=5 // pred_fallthru
        _
      %p549 = scmp.le.s32.totalorder 2, %s18
      // Predicated region
      $region57: #{tpu_custom_call.1} parent=5 // pred_check
        %p550 = pneg %p549
      $region58: #{tpu_custom_call.1} parent=5 // pred_check_branch
        %552 = sbr.rel (%p550) target = $region60
      $region59: #{tpu_custom_call.1} parent=5 // pred_region
        %s553 = ssub.s32 %s18, 2
        // Predicated region
        $region61: #{tpu_custom_call.1} parent=59 // pred_check
          %p554 = pneg %p157
        $region62: #{tpu_custom_call.1} parent=59 // pred_check_branch
          %556 = sbr.rel (%p554) target = $region64
        $region63: #{tpu_custom_call.1} parent=59 // pred_region
          %s557 = sand.u32 %s142, 1
          %s558 = scalar_lea.sflag [#allocation4], %s557
          %s559 = sand.u32 %s142, 1
          %s560 = smul.addr %s559, 8
          %s561 = scalar_lea.vmem [#allocation8], %s560
          %562 = dma.done %s558, 128
        $region64: #{tpu_custom_call.1} parent=59 // pred_fallthru
          _
      $region60: #{tpu_custom_call.1} parent=5 // pred_fallthru
        _
    $region6: #{tpu_custom_call.1} parent=1 // loop_footer
      %s22 = sadd.s32 1, %s18
    $region7: #{tpu_custom_call.1} parent=1 // loop_footer_branch
      %17 = sbr.rel target = $region3
    $region8: #{tpu_custom_call.1} parent=1 // loop_exit
      _
    %563 = vsyncpa [#allocation3], 1
    %s564 = scalar_lea.sflag [#allocation3], 1
    %565 = vsyncpa %s564, 1
    %566 = vsyncpa [#allocation6], 1
    %567 = vsyncpa [#allocation4], 1
    %s568 = scalar_lea.sflag [#allocation4], 1
    %569 = vsyncpa %s568, 1

</llo_original>
